<compile_context>
chip_gen: v7x
topology: tpu7x:2x2x1
jax: 0.10.0
libtpu: 0.0.40
codegen_flags: <defaults>
</compile_context>

<pallas_src>
import math
import jax
import jax.numpy as jnp
from jax.experimental import pallas as pl
from jax.experimental.pallas import tpu as pltpu

INPUT_SIZE = 100      # module constant; fc1 (100->120) is never used in forward
FC2_IN, FC2_OUT = 120, 84
FC3_OUT = 10
LANE = 128


def _round_up(x, m):
    return (x + m - 1) // m * m


def _mlp_kernel(x_ref, w2_ref, b2_ref, w3_ref, b3_ref, o_ref):
    # Cast the streamed f32 rows to bf16 in-kernel (free under memory slack).
    x = x_ref[...].astype(jnp.bfloat16)
    # fc2: bf16 operands, f32 accumulation on the MXU (hidden padded to 128 lanes;
    # padded lanes are relu(0 + 0) = 0, so they contribute nothing to fc3).
    h = jnp.dot(x, w2_ref[...], preferred_element_type=jnp.float32)
    h = jnp.maximum(h + b2_ref[...], 0.0)
    # fc3: second MXU pass with bf16 operands, f32 accumulation.
    y = jnp.dot(h.astype(jnp.bfloat16), w3_ref[...],
                preferred_element_type=jnp.float32)
    o_ref[...] = y + b3_ref[...]            # o_ref is f32 (tb, 10)


def prepare_params(w2, b2, w3, b3):
    """Pad/cast the weights once (hoisted out of the per-call forward path).
    w2: (120, 84), b2: (84,), w3: (84, 10), b3: (10,)."""
    w2p = jnp.zeros((FC2_IN, LANE), jnp.bfloat16).at[:, :FC2_OUT].set(
        w2.astype(jnp.bfloat16))
    b2p = jnp.zeros((1, LANE), jnp.float32).at[0, :FC2_OUT].set(
        b2.astype(jnp.float32))
    w3p = jnp.zeros((LANE, FC3_OUT), jnp.bfloat16).at[:FC2_OUT, :].set(
        w3.astype(jnp.bfloat16))
    b3p = b3.astype(jnp.float32).reshape(1, FC3_OUT)
    return w2p, b2p, w3p, b3p


def net_forward(x, w2p, b2p, w3p, b3p, *, block_rows=4096):
    """x: (B, 120) f32; padded params from prepare_params(). Returns (B, 10) f32."""
    B = x.shape[0]
    x = x.astype(jnp.float32)

    # Batch tile: multiple of 8, capped at block_rows (<= 8192), and capped so the
    # parallel batch axis has >= ~4 grid steps when B is large (v7x 2-TC split).
    tb_cap = min(int(block_rows), 8192)
    quarter = max(8, _round_up(-(-B // 4), 8))
    tb = min(tb_cap, _round_up(B, 8), quarter)
    b_pad = _round_up(B, tb)

    # Only a batch-row zero-pad when needed (exact: zero rows give zero outputs).
    x_in = x if b_pad == B else jnp.pad(x, ((0, b_pad - B), (0, 0)))

    grid = (b_pad // tb,)

    # VMEM budget: double-buffered f32 x/out tiles + f32/bf16 intermediates
    # (bf16 x, f32 h, bf16 h) + resident weights + headroom.
    io_bytes = 2 * (tb * FC2_IN * 4 + tb * FC3_OUT * 4)
    interm_bytes = 3 * tb * LANE * 4
    weight_bytes = (FC2_IN * LANE + LANE * FC3_OUT) * 2 + (LANE + FC3_OUT) * 4
    vmem_limit = max(io_bytes + interm_bytes + 2 * weight_bytes + (2 << 20),
                     8 << 20)

    cost = pl.CostEstimate(
        flops=2 * b_pad * (FC2_IN * LANE + LANE * FC3_OUT),
        transcendentals=0,
        bytes_accessed=(b_pad * FC2_IN * 4          # f32 x read
                        + b_pad * FC3_OUT * 4       # f32 out write
                        + (FC2_IN * LANE + LANE * FC3_OUT) * 2   # bf16 weights
                        + (LANE + FC3_OUT) * 4),    # f32 biases
    )

    out = pl.pallas_call(
        _mlp_kernel,
        out_shape=jax.ShapeDtypeStruct((b_pad, FC3_OUT), jnp.float32),
        grid=grid,
        in_specs=[
            pl.BlockSpec((tb, FC2_IN), lambda i: (i, 0)),     # x   (streamed f32)
            pl.BlockSpec((FC2_IN, LANE), lambda i: (0, 0)),   # w2p (resident)
            pl.BlockSpec((1, LANE), lambda i: (0, 0)),        # b2p (resident)
            pl.BlockSpec((LANE, FC3_OUT), lambda i: (0, 0)),  # w3p (resident)
            pl.BlockSpec((1, FC3_OUT), lambda i: (0, 0)),     # b3p (resident)
        ],
        out_specs=pl.BlockSpec((tb, FC3_OUT), lambda i: (i, 0)),
        compiler_params=pltpu.CompilerParams(
            dimension_semantics=("parallel",),
            vmem_limit_bytes=int(vmem_limit),
        ),
        cost_estimate=cost,
    )(x_in, w2p, b2p, w3p, b3p)

    # Only batch padding (if any) to remove; output is already (.., 10) f32.
    return out if b_pad == B else out[:B]


def _init_linear(key, fan_in, fan_out, dtype=jnp.float32):
    """Deterministic init mimicking torch.nn.Linear defaults.
    W is (fan_in, fan_out) (transposed vs. PyTorch), b is (fan_out,)."""
    kw, kb = jax.random.split(key)
    bound = 1.0 / math.sqrt(fan_in)
    w = jax.random.uniform(kw, (fan_in, fan_out), dtype, -bound, bound)
    b = jax.random.uniform(kb, (fan_out,), dtype, -bound, bound)
    return w, b


if __name__ == "__main__":
    key = jax.random.PRNGKey(0)
    k_x, k_fc1, k_fc2, k_fc3 = jax.random.split(key, 4)

    # fc1 exists in __init__ but is not used in forward; initialize for fidelity.
    _w1, _b1 = _init_linear(k_fc1, INPUT_SIZE, 120)
    w2, b2 = _init_linear(k_fc2, FC2_IN, FC2_OUT)
    w3, b3 = _init_linear(k_fc3, FC2_OUT, FC3_OUT)

    # forward starts at fc2, so inputs have 120 features
    batch = 8
    x = jax.random.normal(k_x, (batch, FC2_IN), jnp.float32)

    params = prepare_params(w2, b2, w3, b3)   # pad/cast once (hoisted)
    y = net_forward(x, *params)
    y = jax.block_until_ready(y)

    # reference computed with the same bf16-quantized operands (f32 math)
    xb = x.astype(jnp.bfloat16).astype(jnp.float32)
    w2b = w2.astype(jnp.bfloat16).astype(jnp.float32)
    w3b = w3.astype(jnp.bfloat16).astype(jnp.float32)
    ref = jnp.maximum(xb @ w2b + b2, 0.0) @ w3b + b3

    assert y.shape == (batch, FC3_OUT)
    assert y.dtype == jnp.float32
    assert jnp.allclose(y, ref, atol=2e-2, rtol=2e-2), float(
        jnp.max(jnp.abs(y - ref)))
    print("KERNEL_OK")
</pallas_src>

<mosaic_0001>
module attributes {stable_mosaic.version = 11 : i64} {
  func.func @_mlp_kernel(%arg0: i32, %arg1: memref<8x120xf32, #tpu.memory_space<vmem>>, %arg2: memref<120x128xbf16, #tpu.memory_space<vmem>>, %arg3: memref<1x128xf32, #tpu.memory_space<vmem>>, %arg4: memref<128x10xbf16, #tpu.memory_space<vmem>>, %arg5: memref<1x10xf32, #tpu.memory_space<vmem>>, %arg6: memref<8x10xf32, #tpu.memory_space<vmem>>) attributes {dimension_semantics = [#tpu.dimension_semantics<parallel>], iteration_bounds = array<i64: 1>, scalar_prefetch = 0 : i64, scratch_operands = 0 : i64, tpu.core_type = #tpu.core_type<tc>, window_params = [{transform_indices = @transform_0, window_bounds = array<i64: 8, 120>}, {pipeline_mode = #tpu.pipeline_mode<synchronous>, transform_indices = @transform_1, window_bounds = array<i64: 120, 128>}, {pipeline_mode = #tpu.pipeline_mode<synchronous>, transform_indices = @transform_2, window_bounds = array<i64: 1, 128>}, {pipeline_mode = #tpu.pipeline_mode<synchronous>, transform_indices = @transform_3, window_bounds = array<i64: 128, 10>}, {pipeline_mode = #tpu.pipeline_mode<synchronous>, transform_indices = @transform_4, window_bounds = array<i64: 1, 10>}, {transform_indices = @transform_5, window_bounds = array<i64: 8, 10>}]} {
    %c0 = arith.constant 0 : index
    %c0_0 = arith.constant 0 : index
    %0 = vector.load %arg1[%c0, %c0_0] : memref<8x120xf32, #tpu.memory_space<vmem>>, vector<8x120xf32>
    %1 = arith.truncf %0 : vector<8x120xf32> to vector<8x120xbf16>
    %c0_1 = arith.constant 0 : index
    %c0_2 = arith.constant 0 : index
    %2 = vector.load %arg2[%c0_1, %c0_2] : memref<120x128xbf16, #tpu.memory_space<vmem>>, vector<120x128xbf16>
    %cst = arith.constant dense<0.000000e+00> : vector<8x128xf32>
    %3 = tpu.matmul %1, %2, %cst {dimension_numbers = #tpu.dot_dimension_numbers<[1], [0], [0], [1], [0, 0, 1, 1], [], []>} : vector<8x120xbf16>, vector<120x128xbf16>, vector<8x128xf32> -> vector<8x128xf32>
    %c0_3 = arith.constant 0 : index
    %c0_4 = arith.constant 0 : index
    %4 = vector.load %arg3[%c0_3, %c0_4] : memref<1x128xf32, #tpu.memory_space<vmem>>, vector<1x128xf32>
    %5 = vector.broadcast %4 : vector<1x128xf32> to vector<8x128xf32>
    %6 = arith.addf %3, %5 : vector<8x128xf32>
    %cst_5 = arith.constant 0.000000e+00 : f32
    %7 = vector.broadcast %cst_5 : f32 to vector<8x128xf32>
    %8 = arith.maximumf %6, %7 : vector<8x128xf32>
    %9 = arith.truncf %8 : vector<8x128xf32> to vector<8x128xbf16>
    %c0_6 = arith.constant 0 : index
    %c0_7 = arith.constant 0 : index
    %10 = vector.load %arg4[%c0_6, %c0_7] : memref<128x10xbf16, #tpu.memory_space<vmem>>, vector<128x10xbf16>
    %cst_8 = arith.constant dense<0.000000e+00> : vector<8x10xf32>
    %11 = tpu.matmul %9, %10, %cst_8 {dimension_numbers = #tpu.dot_dimension_numbers<[1], [0], [0], [1], [0, 0, 1, 1], [], []>} : vector<8x128xbf16>, vector<128x10xbf16>, vector<8x10xf32> -> vector<8x10xf32>
    %c0_9 = arith.constant 0 : index
    %c0_10 = arith.constant 0 : index
    %12 = vector.load %arg5[%c0_9, %c0_10] : memref<1x10xf32, #tpu.memory_space<vmem>>, vector<1x10xf32>
    %13 = vector.broadcast %12 : vector<1x10xf32> to vector<8x10xf32>
    %14 = arith.addf %11, %13 : vector<8x10xf32>
    %c0_11 = arith.constant 0 : index
    %c0_12 = arith.constant 0 : index
    %15 = vector.load %arg6[%c0_11, %c0_12] : memref<8x10xf32, #tpu.memory_space<vmem>>, vector<8x10xf32>
    tpu.vector_store %arg6[%c0_11, %c0_12], %14 {strides = array<i32>} : memref<8x10xf32, #tpu.memory_space<vmem>>, vector<8x10xf32>,
    return
  }
  func.func @transform_0(%arg0: i32) -> (i32, i32) {
    %c0_i32 = arith.constant 0 : i32
    %c0_i32_0 = arith.constant 0 : i32
    return %arg0, %c0_i32 : i32, i32
  }
  func.func @transform_1(%arg0: i32) -> (i32, i32) {
    %c0_i32 = arith.constant 0 : i32
    %c0_i32_0 = arith.constant 0 : i32
    %c0_i32_1 = arith.constant 0 : i32
    return %c0_i32, %c0_i32_0 : i32, i32
  }
  func.func @transform_2(%arg0: i32) -> (i32, i32) {
    %c0_i32 = arith.constant 0 : i32
    %c0_i32_0 = arith.constant 0 : i32
    %c0_i32_1 = arith.constant 0 : i32
    return %c0_i32, %c0_i32_0 : i32, i32
  }
  func.func @transform_3(%arg0: i32) -> (i32, i32) {
    %c0_i32 = arith.constant 0 : i32
    %c0_i32_0 = arith.constant 0 : i32
    %c0_i32_1 = arith.constant 0 : i32
    return %c0_i32, %c0_i32_0 : i32, i32
  }
  func.func @transform_4(%arg0: i32) -> (i32, i32) {
    %c0_i32 = arith.constant 0 : i32
    %c0_i32_0 = arith.constant 0 : i32
    %c0_i32_1 = arith.constant 0 : i32
    return %c0_i32, %c0_i32_0 : i32, i32
  }
  func.func @transform_5(%arg0: i32) -> (i32, i32) {
    %c0_i32 = arith.constant 0 : i32
    %c0_i32_0 = arith.constant 0 : i32
    return %arg0, %c0_i32 : i32, i32
  }
}

</mosaic_0001>

<llo_original>
// kernel: tpu_custom_call.1
$region0: #{tpu_custom_call.1}
  #allocation0 [shape = 'u32[]', space=smem, size = 0x4, offset = 0x4, fixed_abs, tag = 'smem constant byte address 0x4 - core index']
  #allocation1 [shape = 'u32[144,128]{1,0:T(1,128)}', space=vmem, size = 0x12000, scoped, tag = 'internal scratch']
  %s0 = inlined_call_operand.vmem [shape: f32[8,120], index: 0, kind: input, shape index: {}]
  %s1 = inlined_call_operand.vmem [shape: bf16[120,128], index: 1, kind: input, shape index: {}]
  %s2 = inlined_call_operand.vmem [shape: f32[1,128], index: 2, kind: input, shape index: {}]
  %s3 = inlined_call_operand.vmem [shape: bf16[128,10], index: 3, kind: input, shape index: {}]
  %s4 = inlined_call_operand.vmem [shape: f32[1,10], index: 4, kind: input, shape index: {}]
  %s5 = inlined_call_operand.hbm [shape: f32[8,10], index: 5, kind: output, shape index: {}]
  %s6 = sld [smem:[#allocation0]]
  $region30: #{tpu_custom_call.1} parent=0
    _
  %s8 = ssub.s32 1, %s6
  %s9 = scalar_select 0, %s8, %s6
  $region1: #{tpu_custom_call.1} parent=0
    #allocation2 [shape = 'u8[4096]{0}', space=vmem, size = 0x1000, scoped, tag = 'output window, operand 0, single buffered']
    #allocation3 [shape = 's32[1]{0}', space=sflag, size = 0x4, scoped, tag = 'scoped memory for tpu_custom_call.1']
    %10 = vsyncpa [#allocation3], 0
    // Predicated region
    $region2: #{tpu_custom_call.1} parent=1 // pred_check
      _
    $region3: #{tpu_custom_call.1} parent=1 // pred_check_branch
      %12 = sbr.rel (0) target = $region5
    $region4: #{tpu_custom_call.1} parent=1 // pred_region
      _
    $region5: #{tpu_custom_call.1} parent=1 // pred_fallthru
      _
    // Predicated region
    $region6: #{tpu_custom_call.1} parent=1 // pred_check
      _
    $region7: #{tpu_custom_call.1} parent=1 // pred_check_branch
      %14 = sbr.rel (0) target = $region9
    $region8: #{tpu_custom_call.1} parent=1 // pred_region
      _
    $region9: #{tpu_custom_call.1} parent=1 // pred_fallthru
      _
    // Predicated region
    $region10: #{tpu_custom_call.1} parent=1 // pred_check
      _
    $region11: #{tpu_custom_call.1} parent=1 // pred_check_branch
      %16 = sbr.rel (0) target = $region13
    $region12: #{tpu_custom_call.1} parent=1 // pred_region
      _
    $region13: #{tpu_custom_call.1} parent=1 // pred_fallthru
      _
    // Predicated region
    $region14: #{tpu_custom_call.1} parent=1 // pred_check
      _
    $region15: #{tpu_custom_call.1} parent=1 // pred_check_branch
      %18 = sbr.rel (0) target = $region17
    $region16: #{tpu_custom_call.1} parent=1 // pred_region
      _
    $region17: #{tpu_custom_call.1} parent=1 // pred_fallthru
      _
    // Predicated region
    $region18: #{tpu_custom_call.1} parent=1 // pred_check
      _
    $region19: #{tpu_custom_call.1} parent=1 // pred_check_branch
      %20 = sbr.rel (0) target = $region21
    $region20: #{tpu_custom_call.1} parent=1 // pred_region
      _
    $region21: #{tpu_custom_call.1} parent=1 // pred_fallthru
      _
    %v22 = vld [vmem:[%s0] sm:$0xff]
    %v23 = vpack.c.bf16 %v22, %v22
    %v24 = vld [vmem:[%s1] sm:$0xf]
    %v25 = vld [vmem:[%s1 + $0x4] sm:$0xf]
    %v26 = vld [vmem:[%s1 + $0x8] sm:$0xf]
    %v27 = vld [vmem:[%s1 + $0xc] sm:$0xf]
    %v28 = vld [vmem:[%s1 + $0x10] sm:$0xf]
    %v29 = vld [vmem:[%s1 + $0x14] sm:$0xf]
    %v30 = vld [vmem:[%s1 + $0x18] sm:$0xf]
    %v31 = vld [vmem:[%s1 + $0x1c] sm:$0xf]
    %v32 = vld [vmem:[%s1 + $0x20] sm:$0xf]
    %v33 = vld [vmem:[%s1 + $0x24] sm:$0xf]
    %v34 = vld [vmem:[%s1 + $0x28] sm:$0xf]
    %v35 = vld [vmem:[%s1 + $0x2c] sm:$0xf]
    %v36 = vld [vmem:[%s1 + $0x30] sm:$0xf]
    %v37 = vld [vmem:[%s1 + $0x34] sm:$0xf]
    %v38 = vld [vmem:[%s1 + $0x38] sm:$0xf]
    %v39 = vld [vmem:[%s2] sm:$0x1]
    %v41 = vlaneseq
    %v42 = vshrl.u32 %v41, 7
    %v43 = vsub.s32 0, %v42
    %v44 = vrot.slane %v39, %v43
    %v61 = vunpack.c.l.b16 %v24
    %v62 = vunpack.c.l.b16 %v25
    %v63 = vunpack.c.l.b16 %v26
    %v64 = vunpack.c.l.b16 %v27
    %v65 = vunpack.c.l.b16 %v28
    %v66 = vunpack.c.l.b16 %v29
    %v67 = vunpack.c.l.b16 %v30
    %v68 = vunpack.c.l.b16 %v31
    %v69 = vunpack.c.l.b16 %v32
    %v70 = vunpack.c.l.b16 %v33
    %v71 = vunpack.c.l.b16 %v34
    %v72 = vunpack.c.l.b16 %v35
    %v73 = vunpack.c.l.b16 %v36
    %v74 = vunpack.c.l.b16 %v37
    %v75 = vunpack.c.l.b16 %v38
    %v76 = vpack.c.b16 %v62, %v61
    %v77 = vpack.c.b16 %v64, %v63
    %v78 = vpack.c.b16 %v66, %v65
    %v79 = vpack.c.b16 %v68, %v67
    %v80 = vpack.c.b16 %v70, %v69
    %v81 = vpack.c.b16 %v72, %v71
    %v82 = vpack.c.b16 %v74, %v73
    %v83 = vpack.c.b16 %v75, %v75
    %vm91 = vcmask 982016
    %v93 = vsel %vm91, %v23, 0
    %vm95 = vcmask 1043456
    %v97 = vsel %vm95, %v83, 0
    %99 = vmatprep.subr.bf16.mxu0 0
    %100 = vmatpush1.bf16.msra.mxu0 %v76
    %101 = vmatprep.subr.bf16.mxu0 0
    %102 = vmatpush1.bf16.msra.mxu0 %v77
    %103 = vmatprep.subr.bf16.mxu0 0
    %104 = vmatpush1.bf16.msra.mxu0 %v78
    %105 = vmatprep.subr.bf16.mxu0 0
    %106 = vmatpush1.bf16.msra.mxu0 %v79
    %107 = vmatprep.subr.bf16.mxu0 0
    %108 = vmatpush1.bf16.msra.mxu0 %v80
    %109 = vmatprep.subr.bf16.mxu0 0
    %110 = vmatpush1.bf16.msra.mxu0 %v81
    %111 = vmatprep.subr.bf16.mxu0 0
    %112 = vmatpush1.bf16.msra.mxu0 %v82
    %113 = vmatprep.subr.bf16.mxu0 0
    %114 = vmatpush1.bf16.msra.mxu0 %v97
    %115 = vmatprep.subr.bf16.mxu0 0
    %116 = vmatpush1.bf16.msra.mxu0 0
    %117 = vmatprep.subr.bf16.mxu0 0
    %118 = vmatpush1.bf16.msra.mxu0 0
    %119 = vmatprep.subr.bf16.mxu0 0
    %120 = vmatpush1.bf16.msra.mxu0 0
    %121 = vmatprep.subr.bf16.mxu0 0
    %122 = vmatpush1.bf16.msra.mxu0 0
    %123 = vmatprep.subr.bf16.mxu0 0
    %124 = vmatpush1.bf16.msra.mxu0 0
    %125 = vmatprep.subr.bf16.mxu0 0
    %126 = vmatpush1.bf16.msra.mxu0 0
    %127 = vmatprep.subr.bf16.mxu0 0
    %128 = vmatpush1.bf16.msra.mxu0 0
    %129 = vmatprep.subr.bf16.mxu0 0
    %130 = vmatpush1.bf16.msra.mxu0 0
    %131 = vmatprep.mubr.bf16.mxu0 0
    %132 = vmatmul.mubr.bf16.gmra.mrb[0].mxu0 %v93
    %v133 = vpop.f32.mrb[0].mxu0
    %v134 = vadd.f32 %v44, %v133
    %v135 = vpop.f32.mrb[0].mxu0
    %v136 = vpop.f32.mrb[0].mxu0
    %v137 = vpop.f32.mrb[0].mxu0
    %138 = vdwg.mxu0
    %v139 = vmax.f32 %v134, 0.0
    %v140 = vpack.c.bf16 %v139, %v139
    %v141 = vld [vmem:[%s3] sm:$0xf]
    %v142 = vld [vmem:[%s3 + $0x4] sm:$0xf]
    %v143 = vld [vmem:[%s3 + $0x8] sm:$0xf]
    %v144 = vld [vmem:[%s3 + $0xc] sm:$0xf]
    %v145 = vld [vmem:[%s3 + $0x10] sm:$0xf]
    %v146 = vld [vmem:[%s3 + $0x14] sm:$0xf]
    %v147 = vld [vmem:[%s3 + $0x18] sm:$0xf]
    %v148 = vld [vmem:[%s3 + $0x1c] sm:$0xf]
    %v149 = vld [vmem:[%s3 + $0x20] sm:$0xf]
    %v150 = vld [vmem:[%s3 + $0x24] sm:$0xf]
    %v151 = vld [vmem:[%s3 + $0x28] sm:$0xf]
    %v152 = vld [vmem:[%s3 + $0x2c] sm:$0xf]
    %v153 = vld [vmem:[%s3 + $0x30] sm:$0xf]
    %v154 = vld [vmem:[%s3 + $0x34] sm:$0xf]
    %v155 = vld [vmem:[%s3 + $0x38] sm:$0xf]
    %v156 = vld [vmem:[%s3 + $0x3c] sm:$0xf]
    %v157 = vld [vmem:[%s4] sm:$0x1]
    %v159 = vlaneseq
    %v160 = vshrl.u32 %v159, 7
    %v161 = vsub.s32 0, %v160
    %v162 = vrot.slane %v157, %v161
    %v180 = vunpack.c.l.b16 %v141
    %v181 = vunpack.c.l.b16 %v142
    %v182 = vunpack.c.l.b16 %v143
    %v183 = vunpack.c.l.b16 %v144
    %v184 = vunpack.c.l.b16 %v145
    %v185 = vunpack.c.l.b16 %v146
    %v186 = vunpack.c.l.b16 %v147
    %v187 = vunpack.c.l.b16 %v148
    %v188 = vunpack.c.l.b16 %v149
    %v189 = vunpack.c.l.b16 %v150
    %v190 = vunpack.c.l.b16 %v151
    %v191 = vunpack.c.l.b16 %v152
    %v192 = vunpack.c.l.b16 %v153
    %v193 = vunpack.c.l.b16 %v154
    %v194 = vunpack.c.l.b16 %v155
    %v195 = vunpack.c.l.b16 %v156
    %v196 = vpack.c.b16 %v181, %v180
    %v197 = vpack.c.b16 %v183, %v182
    %v198 = vpack.c.b16 %v185, %v184
    %v199 = vpack.c.b16 %v187, %v186
    %v200 = vpack.c.b16 %v189, %v188
    %v201 = vpack.c.b16 %v191, %v190
    %v202 = vpack.c.b16 %v193, %v192
    %v203 = vpack.c.b16 %v195, %v194
    %212 = vmatprep.subr.bf16.mxu0 0
    %213 = vmatpush1.bf16.msra.mxu0 %v196
    %214 = vmatprep.subr.bf16.mxu0 0
    %215 = vmatpush1.bf16.msra.mxu0 %v197
    %216 = vmatprep.subr.bf16.mxu0 0
    %217 = vmatpush1.bf16.msra.mxu0 %v198
    %218 = vmatprep.subr.bf16.mxu0 0
    %219 = vmatpush1.bf16.msra.mxu0 %v199
    %220 = vmatprep.subr.bf16.mxu0 0
    %221 = vmatpush1.bf16.msra.mxu0 %v200
    %222 = vmatprep.subr.bf16.mxu0 0
    %223 = vmatpush1.bf16.msra.mxu0 %v201
    %224 = vmatprep.subr.bf16.mxu0 0
    %225 = vmatpush1.bf16.msra.mxu0 %v202
    %226 = vmatprep.subr.bf16.mxu0 0
    %227 = vmatpush1.bf16.msra.mxu0 %v203
    %228 = vmatprep.subr.bf16.mxu0 0
    %229 = vmatpush1.bf16.msra.mxu0 0
    %230 = vmatprep.subr.bf16.mxu0 0
    %231 = vmatpush1.bf16.msra.mxu0 0
    %232 = vmatprep.subr.bf16.mxu0 0
    %233 = vmatpush1.bf16.msra.mxu0 0
    %234 = vmatprep.subr.bf16.mxu0 0
    %235 = vmatpush1.bf16.msra.mxu0 0
    %236 = vmatprep.subr.bf16.mxu0 0
    %237 = vmatpush1.bf16.msra.mxu0 0
    %238 = vmatprep.subr.bf16.mxu0 0
    %239 = vmatpush1.bf16.msra.mxu0 0
    %240 = vmatprep.subr.bf16.mxu0 0
    %241 = vmatpush1.bf16.msra.mxu0 0
    %242 = vmatprep.subr.bf16.mxu0 0
    %243 = vmatpush1.bf16.msra.mxu0 0
    %244 = vmatprep.mubr.bf16.mxu0 0
    %245 = vmatmul.mubr.bf16.gmra.mrb[0].mxu0 %v140
    %v246 = vpop.f32.mrb[0].mxu0
    %v247 = vadd.f32 %v162, %v246
    %v248 = vpop.f32.mrb[0].mxu0
    %v249 = vpop.f32.mrb[0].mxu0
    %v250 = vpop.f32.mrb[0].mxu0
    %251 = vdwg.mxu0
    %vm252 = vcmask 80896
    %253 = vst.msk [vmem:[#allocation2] sm:$0xff] %vm252, %v247
    // Predicated region
    $region22: #{tpu_custom_call.1} parent=1 // pred_check
      _
    $region23: #{tpu_custom_call.1} parent=1 // pred_check_branch
      %255 = sbr.rel (0) target = $region25
    $region24: #{tpu_custom_call.1} parent=1 // pred_region
      %s257 = ssub.s32 128, 128
      %258 = vsyncadd [#allocation3], %s257
      %s260 = sshll.u32 [#allocation2], 4
      %s261 = int_to_ptr.vmem [resolvable:$true] %s260
      %263 = dma.vmem_to_hbm [thread:$0]  %s261, 128, %s5, [#allocation3]
    $region25: #{tpu_custom_call.1} parent=1 // pred_fallthru
      _
    // Predicated region
    $region26: #{tpu_custom_call.1} parent=1 // pred_check
      _
    $region27: #{tpu_custom_call.1} parent=1 // pred_check_branch
      %265 = sbr.rel (0) target = $region29
    $region28: #{tpu_custom_call.1} parent=1 // pred_region
      %266 = dma.done [#allocation3], 128
    $region29: #{tpu_custom_call.1} parent=1 // pred_fallthru
      _
    %267 = vsyncpa [#allocation3], 1

</llo_original>
